<compile_context>
chip_gen: v7x
topology: tpu7x:2x2x1
jax: 0.10.0
libtpu: 0.0.40
codegen_flags: <defaults>
</compile_context>

<pallas_src>
import functools

import jax
import jax.numpy as jnp
import numpy as np
from jax import lax
from jax.experimental import pallas as pl
from jax.experimental.pallas import tpu as pltpu


# ---------------- tile-size helpers ----------------

def _round_up(x, m):
    return (x + m - 1) // m * m


def _pick_th(H, W):
    """Row-tile height: a divisor of H giving an MXU M-dim (th*W) near 128 rows."""
    divs = [d for d in range(1, H + 1) if H % d == 0]
    return min(divs, key=lambda d: abs(d * W - 128))


def _pick_tn(Cout):
    """Cout tile: lane-dense (multiple of 128) when possible, else the full Cout."""
    if Cout % 256 == 0:
        return 256
    if Cout % 128 == 0:
        return 128
    return Cout


# ---------------- Pallas kernel ----------------

def _sepconv_kernel(x_ref, dw_ref, pw_ref, o_ref, dws_ref, *, th, W):
    """Fused depthwise-3x3 (pad=1, stride=1) + pointwise-1x1 for one (n, h, j) tile.

    x_ref  : (1, H+2, Wp, Cin)  f32   whole padded sample (resident across h, j)
    dw_ref : (9, Cin)           f32   depthwise taps
    pw_ref : (Cin, tn)          bf16  pointwise weight column block
    o_ref  : (1, th, W, tn)     f32   output row/Cout tile
    dws_ref: (th*W, Cin)        bf16  depthwise-output scratch (shared across j)
    """
    h = pl.program_id(1)
    j = pl.program_id(2)
    Cin = dws_ref.shape[-1]

    @pl.when(j == 0)
    def _():
        # Depthwise 3x3 as 9 shifted multiply-accumulates on the VPU (f32 math).
        xwin = x_ref[0, pl.ds(h * th, th + 2), :, :]          # (th+2, Wp, Cin)
        acc = jnp.zeros((th, W, Cin), jnp.float32)
        for dy in range(3):
            for dx in range(3):
                wk = dw_ref[3 * dy + dx, :].reshape(1, 1, Cin)
                acc = acc + xwin[dy:dy + th, dx:dx + W, :] * wk
        dws_ref[...] = acc.reshape(th * W, Cin).astype(dws_ref.dtype)

    # Pointwise 1x1 on the MXU: (th*W, Cin) @ (Cin, tn) with f32 accumulation.
    y = jnp.dot(dws_ref[...], pw_ref[...], preferred_element_type=jnp.float32)
    o_ref[...] = y.reshape(1, th, W, o_ref.shape[-1])


# ---------------- Pallas wrapper (NHWC) ----------------

def sepconv2d_nhwc(x, dw, pw):
    """x: (N,H,W,Cin) f32; dw: (3,3,Cin); pw: (Cin,Cout). Returns (N,H,W,Cout) f32."""
    N, H, W, Cin = x.shape
    Cout = pw.shape[1]
    th = _pick_th(H, W)
    tn = _pick_tn(Cout)
    Wp = _round_up(W + 2, 8)          # sublane-aligned padded width
    Hp = H + 2

    xp = jnp.pad(x.astype(jnp.float32),
                 ((0, 0), (1, 1), (1, Wp - W - 1), (0, 0)))
    dwf = dw.reshape(9, Cin).astype(jnp.float32)
    pwb = pw.astype(jnp.bfloat16)     # MXU path in bf16

    kern = functools.partial(_sepconv_kernel, th=th, W=W)
    return pl.pallas_call(
        kern,
        out_shape=jax.ShapeDtypeStruct((N, H, W, Cout), jnp.float32),
        grid=(N, H // th, Cout // tn),
        in_specs=[
            pl.BlockSpec((1, Hp, Wp, Cin), lambda n, h, j: (n, 0, 0, 0)),
            pl.BlockSpec((9, Cin), lambda n, h, j: (0, 0)),
            pl.BlockSpec((Cin, tn), lambda n, h, j: (0, j)),
        ],
        out_specs=pl.BlockSpec((1, th, W, tn), lambda n, h, j: (n, h, 0, j)),
        scratch_shapes=[pltpu.VMEM((th * W, Cin), jnp.bfloat16)],
        compiler_params=pltpu.CompilerParams(
            dimension_semantics=("parallel", "parallel", "arbitrary")),
    )(xp, dwf, pwb)


# ---------------- public entry point (PyTorch-style NCHW + weights) ----------------

@jax.jit
def seperable_conv2d(x_nchw, dw_oihw, pw_oihw):
    """SeperableConv2d.forward: depthwise 3x3 (pad=1, groups=Cin, no bias) then 1x1 (no bias).

    x_nchw : (N, Cin, H, W)
    dw_oihw: (Cin, 1, 3, 3)   PyTorch depthwise weight
    pw_oihw: (Cout, Cin, 1, 1) PyTorch pointwise weight
    """
    x = jnp.transpose(x_nchw, (0, 2, 3, 1)).astype(jnp.float32)    # NCHW -> NHWC
    Cin = x.shape[-1]
    Cout = pw_oihw.shape[0]
    dw = jnp.transpose(dw_oihw.reshape(Cin, 3, 3), (1, 2, 0))       # (3,3,Cin)
    pw = jnp.transpose(pw_oihw.reshape(Cout, Cin), (1, 0))          # (Cin,Cout)
    y = sepconv2d_nhwc(x, dw, pw)
    return jnp.transpose(y, (0, 3, 1, 2))                           # NHWC -> NCHW


# ---------------- pure-JAX reference (correctness check) ----------------

def ref_seperable_conv2d(x, dw, pw):
    dn = ('NCHW', 'OIHW', 'NCHW')
    Cin = x.shape[1]
    y = lax.conv_general_dilated(x, dw, (1, 1), ((1, 1), (1, 1)),
                                 dimension_numbers=dn, feature_group_count=Cin,
                                 precision=lax.Precision.HIGHEST)
    return lax.conv_general_dilated(y, pw, (1, 1), ((0, 0), (0, 0)),
                                    dimension_numbers=dn,
                                    precision=lax.Precision.HIGHEST)


# ---------------- main ----------------

if __name__ == "__main__":
    key = jax.random.PRNGKey(0)
    kx, kd, kp = jax.random.split(key, 3)
    N, Cin, H, W, Cout = 2, 4, 16, 16, 8

    x = jax.random.normal(kx, (N, Cin, H, W), jnp.float32)
    dw = jax.random.normal(kd, (Cin, 1, 3, 3), jnp.float32) * (2.0 / 9.0) ** 0.5
    pw = jax.random.normal(kp, (Cout, Cin, 1, 1), jnp.float32) * (2.0 / Cin) ** 0.5

    out = jax.block_until_ready(seperable_conv2d(x, dw, pw))
    assert out.shape == (N, Cout, H, W), out.shape

    ref = jax.block_until_ready(ref_seperable_conv2d(x, dw, pw))
    np.testing.assert_allclose(np.asarray(out), np.asarray(ref),
                               atol=5e-2, rtol=5e-2)

    print("KERNEL_OK")
</pallas_src>

<mosaic_0001>
module attributes {stable_mosaic.version = 11 : i64} {
  func.func @_sepconv_kernel(%arg0: i32, %arg1: i32, %arg2: i32, %arg3: memref<1x18x24x4xf32, #tpu.memory_space<vmem>>, %arg4: memref<9x4xf32, #tpu.memory_space<vmem>>, %arg5: memref<4x8xbf16, #tpu.memory_space<vmem>>, %arg6: memref<1x8x16x8xf32, #tpu.memory_space<vmem>>, %arg7: memref<128x4xbf16, #tpu.memory_space<vmem>>) attributes {dimension_semantics = [#tpu.dimension_semantics<parallel>, #tpu.dimension_semantics<parallel>, #tpu.dimension_semantics<arbitrary>], iteration_bounds = array<i64: 2, 2, 1>, scalar_prefetch = 0 : i64, scratch_operands = 1 : i64, tpu.core_type = #tpu.core_type<tc>, window_params = [{transform_indices = @transform_0, window_bounds = array<i64: 1, 18, 24, 4>}, {pipeline_mode = #tpu.pipeline_mode<synchronous>, transform_indices = @transform_1, window_bounds = array<i64: 9, 4>}, {transform_indices = @transform_2, window_bounds = array<i64: 4, 8>}, {transform_indices = @transform_3, window_bounds = array<i64: 1, 8, 16, 8>}]} {
    %c0_i32 = arith.constant 0 : i32
    %0 = arith.cmpi eq, %arg2, %c0_i32 : i32
    %1 = arith.extui %0 : i1 to i32
    %c0_i32_0 = arith.constant 0 : i32
    %2 = arith.cmpi ne, %1, %c0_i32_0 : i32
    scf.if %2 {
      %c8_i32 = arith.constant 8 : i32
      %8 = arith.muli %arg1, %c8_i32 : i32
      %c0_8 = arith.constant 0 : index
      %9 = arith.index_cast %8 : i32 to index
      %c0_9 = arith.constant 0 : index
      %c0_10 = arith.constant 0 : index
      %10 = vector.load %arg3[%c0_8, %9, %c0_9, %c0_10] : memref<1x18x24x4xf32, #tpu.memory_space<vmem>>, vector<1x10x24x4xf32>
      %11 = vector.shape_cast %10 : vector<1x10x24x4xf32> to vector<10x24x4xf32>
      %cst_11 = arith.constant 0.000000e+00 : f32
      %12 = vector.broadcast %cst_11 : f32 to vector<8x16x4xf32>
      %c0_12 = arith.constant 0 : index
      %c0_13 = arith.constant 0 : index
      %13 = vector.load %arg4[%c0_12, %c0_13] : memref<9x4xf32, #tpu.memory_space<vmem>>, vector<1x4xf32>
      %14 = vector.shape_cast %13 : vector<1x4xf32> to vector<4xf32>
      %15 = vector.shape_cast %14 : vector<4xf32> to vector<1x1x4xf32>
      %16 = vector.extract_strided_slice %11 {offsets = [0, 0, 0], sizes = [8, 16, 4], strides = [1, 1, 1]} : vector<10x24x4xf32> to vector<8x16x4xf32>
      %17 = vector.broadcast %15 : vector<1x1x4xf32> to vector<8x16x4xf32>
      %18 = arith.mulf %16, %17 : vector<8x16x4xf32>
      %19 = arith.addf %12, %18 : vector<8x16x4xf32>
      %c1 = arith.constant 1 : index
      %c0_14 = arith.constant 0 : index
      %20 = vector.load %arg4[%c1, %c0_14] : memref<9x4xf32, #tpu.memory_space<vmem>>, vector<1x4xf32>
      %21 = vector.shape_cast %20 : vector<1x4xf32> to vector<4xf32>
      %22 = vector.shape_cast %21 : vector<4xf32> to vector<1x1x4xf32>
      %23 = vector.extract_strided_slice %11 {offsets = [0, 1, 0], sizes = [8, 16, 4], strides = [1, 1, 1]} : vector<10x24x4xf32> to vector<8x16x4xf32>
      %24 = vector.broadcast %22 : vector<1x1x4xf32> to vector<8x16x4xf32>
      %25 = arith.mulf %23, %24 : vector<8x16x4xf32>
      %26 = arith.addf %19, %25 : vector<8x16x4xf32>
      %c2 = arith.constant 2 : index
      %c0_15 = arith.constant 0 : index
      %27 = vector.load %arg4[%c2, %c0_15] : memref<9x4xf32, #tpu.memory_space<vmem>>, vector<1x4xf32>
      %28 = vector.shape_cast %27 : vector<1x4xf32> to vector<4xf32>
      %29 = vector.shape_cast %28 : vector<4xf32> to vector<1x1x4xf32>
      %30 = vector.extract_strided_slice %11 {offsets = [0, 2, 0], sizes = [8, 16, 4], strides = [1, 1, 1]} : vector<10x24x4xf32> to vector<8x16x4xf32>
      %31 = vector.broadcast %29 : vector<1x1x4xf32> to vector<8x16x4xf32>
      %32 = arith.mulf %30, %31 : vector<8x16x4xf32>
      %33 = arith.addf %26, %32 : vector<8x16x4xf32>
      %c3 = arith.constant 3 : index
      %c0_16 = arith.constant 0 : index
      %34 = vector.load %arg4[%c3, %c0_16] : memref<9x4xf32, #tpu.memory_space<vmem>>, vector<1x4xf32>
      %35 = vector.shape_cast %34 : vector<1x4xf32> to vector<4xf32>
      %36 = vector.shape_cast %35 : vector<4xf32> to vector<1x1x4xf32>
      %37 = vector.extract_strided_slice %11 {offsets = [1, 0, 0], sizes = [8, 16, 4], strides = [1, 1, 1]} : vector<10x24x4xf32> to vector<8x16x4xf32>
      %38 = vector.broadcast %36 : vector<1x1x4xf32> to vector<8x16x4xf32>
      %39 = arith.mulf %37, %38 : vector<8x16x4xf32>
      %40 = arith.addf %33, %39 : vector<8x16x4xf32>
      %c4 = arith.constant 4 : index
      %c0_17 = arith.constant 0 : index
      %41 = vector.load %arg4[%c4, %c0_17] : memref<9x4xf32, #tpu.memory_space<vmem>>, vector<1x4xf32>
      %42 = vector.shape_cast %41 : vector<1x4xf32> to vector<4xf32>
      %43 = vector.shape_cast %42 : vector<4xf32> to vector<1x1x4xf32>
      %44 = vector.extract_strided_slice %11 {offsets = [1, 1, 0], sizes = [8, 16, 4], strides = [1, 1, 1]} : vector<10x24x4xf32> to vector<8x16x4xf32>
      %45 = vector.broadcast %43 : vector<1x1x4xf32> to vector<8x16x4xf32>
      %46 = arith.mulf %44, %45 : vector<8x16x4xf32>
      %47 = arith.addf %40, %46 : vector<8x16x4xf32>
      %c5 = arith.constant 5 : index
      %c0_18 = arith.constant 0 : index
      %48 = vector.load %arg4[%c5, %c0_18] : memref<9x4xf32, #tpu.memory_space<vmem>>, vector<1x4xf32>
      %49 = vector.shape_cast %48 : vector<1x4xf32> to vector<4xf32>
      %50 = vector.shape_cast %49 : vector<4xf32> to vector<1x1x4xf32>
      %51 = vector.extract_strided_slice %11 {offsets = [1, 2, 0], sizes = [8, 16, 4], strides = [1, 1, 1]} : vector<10x24x4xf32> to vector<8x16x4xf32>
      %52 = vector.broadcast %50 : vector<1x1x4xf32> to vector<8x16x4xf32>
      %53 = arith.mulf %51, %52 : vector<8x16x4xf32>
      %54 = arith.addf %47, %53 : vector<8x16x4xf32>
      %c6 = arith.constant 6 : index
      %c0_19 = arith.constant 0 : index
      %55 = vector.load %arg4[%c6, %c0_19] : memref<9x4xf32, #tpu.memory_space<vmem>>, vector<1x4xf32>
      %56 = vector.shape_cast %55 : vector<1x4xf32> to vector<4xf32>
      %57 = vector.shape_cast %56 : vector<4xf32> to vector<1x1x4xf32>
      %58 = vector.extract_strided_slice %11 {offsets = [2, 0, 0], sizes = [8, 16, 4], strides = [1, 1, 1]} : vector<10x24x4xf32> to vector<8x16x4xf32>
      %59 = vector.broadcast %57 : vector<1x1x4xf32> to vector<8x16x4xf32>
      %60 = arith.mulf %58, %59 : vector<8x16x4xf32>
      %61 = arith.addf %54, %60 : vector<8x16x4xf32>
      %c7 = arith.constant 7 : index
      %c0_20 = arith.constant 0 : index
      %62 = vector.load %arg4[%c7, %c0_20] : memref<9x4xf32, #tpu.memory_space<vmem>>, vector<1x4xf32>
      %63 = vector.shape_cast %62 : vector<1x4xf32> to vector<4xf32>
      %64 = vector.shape_cast %63 : vector<4xf32> to vector<1x1x4xf32>
      %65 = vector.extract_strided_slice %11 {offsets = [2, 1, 0], sizes = [8, 16, 4], strides = [1, 1, 1]} : vector<10x24x4xf32> to vector<8x16x4xf32>
      %66 = vector.broadcast %64 : vector<1x1x4xf32> to vector<8x16x4xf32>
      %67 = arith.mulf %65, %66 : vector<8x16x4xf32>
      %68 = arith.addf %61, %67 : vector<8x16x4xf32>
      %c8 = arith.constant 8 : index
      %c0_21 = arith.constant 0 : index
      %69 = vector.load %arg4[%c8, %c0_21] : memref<9x4xf32, #tpu.memory_space<vmem>>, vector<1x4xf32>
      %70 = vector.shape_cast %69 : vector<1x4xf32> to vector<4xf32>
      %71 = vector.shape_cast %70 : vector<4xf32> to vector<1x1x4xf32>
      %72 = vector.extract_strided_slice %11 {offsets = [2, 2, 0], sizes = [8, 16, 4], strides = [1, 1, 1]} : vector<10x24x4xf32> to vector<8x16x4xf32>
      %73 = vector.broadcast %71 : vector<1x1x4xf32> to vector<8x16x4xf32>
      %74 = arith.mulf %72, %73 : vector<8x16x4xf32>
      %75 = arith.addf %68, %74 : vector<8x16x4xf32>
      %76 = vector.shape_cast %75 : vector<8x16x4xf32> to vector<128x4xf32>
      %77 = arith.truncf %76 : vector<128x4xf32> to vector<128x4xbf16>
      %c0_22 = arith.constant 0 : index
      %c0_23 = arith.constant 0 : index
      %78 = vector.load %arg7[%c0_22, %c0_23] : memref<128x4xbf16, #tpu.memory_space<vmem>>, vector<128x4xbf16>
      tpu.vector_store %arg7[%c0_22, %c0_23], %77 {strides = array<i32>} : memref<128x4xbf16, #tpu.memory_space<vmem>>, vector<128x4xbf16>,
    } else {
    }
    %c0 = arith.constant 0 : index
    %c0_1 = arith.constant 0 : index
    %3 = vector.load %arg7[%c0, %c0_1] : memref<128x4xbf16, #tpu.memory_space<vmem>>, vector<128x4xbf16>
    %c0_2 = arith.constant 0 : index
    %c0_3 = arith.constant 0 : index
    %4 = vector.load %arg5[%c0_2, %c0_3] : memref<4x8xbf16, #tpu.memory_space<vmem>>, vector<4x8xbf16>
    %cst = arith.constant dense<0.000000e+00> : vector<128x8xf32>
    %5 = tpu.matmul %3, %4, %cst {dimension_numbers = #tpu.dot_dimension_numbers<[1], [0], [0], [1], [0, 0, 1, 1], [], []>} : vector<128x4xbf16>, vector<4x8xbf16>, vector<128x8xf32> -> vector<128x8xf32>
    %6 = vector.shape_cast %5 : vector<128x8xf32> to vector<1x8x16x8xf32>
    %c0_4 = arith.constant 0 : index
    %c0_5 = arith.constant 0 : index
    %c0_6 = arith.constant 0 : index
    %c0_7 = arith.constant 0 : index
    %7 = vector.load %arg6[%c0_4, %c0_5, %c0_6, %c0_7] : memref<1x8x16x8xf32, #tpu.memory_space<vmem>>, vector<1x8x16x8xf32>
    tpu.vector_store %arg6[%c0_4, %c0_5, %c0_6, %c0_7], %6 {strides = array<i32>} : memref<1x8x16x8xf32, #tpu.memory_space<vmem>>, vector<1x8x16x8xf32>,
    return
  }
  func.func @transform_0(%arg0: i32, %arg1: i32, %arg2: i32) -> (i32, i32, i32, i32) {
    %c0_i32 = arith.constant 0 : i32
    %c0_i32_0 = arith.constant 0 : i32
    %c0_i32_1 = arith.constant 0 : i32
    %c0_i32_2 = arith.constant 0 : i32
    return %arg0, %c0_i32, %c0_i32_0, %c0_i32_1 : i32, i32, i32, i32
  }
  func.func @transform_1(%arg0: i32, %arg1: i32, %arg2: i32) -> (i32, i32) {
    %c0_i32 = arith.constant 0 : i32
    %c0_i32_0 = arith.constant 0 : i32
    %c0_i32_1 = arith.constant 0 : i32
    return %c0_i32, %c0_i32_0 : i32, i32
  }
  func.func @transform_2(%arg0: i32, %arg1: i32, %arg2: i32) -> (i32, i32) {
    %c0_i32 = arith.constant 0 : i32
    %c0_i32_0 = arith.constant 0 : i32
    return %c0_i32, %arg2 : i32, i32
  }
  func.func @transform_3(%arg0: i32, %arg1: i32, %arg2: i32) -> (i32, i32, i32, i32) {
    %c0_i32 = arith.constant 0 : i32
    %c0_i32_0 = arith.constant 0 : i32
    return %arg0, %arg1, %c0_i32, %arg2 : i32, i32, i32, i32
  }
}

</mosaic_0001>

<llo_original>
// kernel: seperable_conv2d.1
$region0: #{seperable_conv2d.1}
  #allocation0 [shape = 'u32[]', space=smem, size = 0x4, offset = 0x4, fixed_abs, tag = 'smem constant byte address 0x4 - core index']
  #allocation1 [shape = 'u32[144,128]{1,0:T(1,128)}', space=vmem, size = 0x12000, scoped, tag = 'internal scratch']
  #allocation2 [shape = 'bf16[128,4]{1,0:T(16,128)(2,1)}', space=vmem, size = 0x8000, scoped, tag = 'scratch operand']
  %s0 = inlined_call_operand.vmem [shape: f32[2,18,24,4], index: 0, kind: input, shape index: {}]
  %s1 = inlined_call_operand.vmem [shape: f32[9,4], index: 1, kind: input, shape index: {}]
  %s2 = inlined_call_operand.vmem [shape: bf16[4,8], index: 2, kind: input, shape index: {}]
  %s3 = inlined_call_operand.vmem [shape: f32[2,16,16,8], index: 3, kind: output, shape index: {}]
  %s4 = sld [smem:[#allocation0]]
  $region49: #{seperable_conv2d.1} parent=0
    _
  %s6 = ssub.s32 1, %s4
  %s7 = scalar_select 0, %s6, %s4
  loop: start=0, step=1, limit=6
  $region2: #{seperable_conv2d.1} parent=0 // loop_pre_header
    _
  $region3: #{seperable_conv2d.1} parent=0 // loop_header
    %s9 = sphi 0, %s13
    %p10 = scmp.ge.s32.totalorder %s9, 6
    %s16 = sphi 0, %s35
    %s17 = sphi 0, %s31
    %s18 = sphi 0, %s27
    %s19 = sphi 0, %s16
    %s20 = sphi 0, %s17
    %s21 = sphi 0, %s18
    %s22 = sphi 0, %s19
    %s23 = sphi 0, %s20
    %s24 = sphi 0, %s21
    %s38 = sphi 0, %s40
    %s41 = sphi 0, %s38
    %s42 = sphi 0, %s41
    %s58 = sphi 0, %s42
    %s62 = sphi 0, %s62
    %s64 = sphi 0, %s62
    %s65 = sphi 0, %s64
    %s79 = sphi 0, %s65
    %s85 = sphi 0, %s87
    %s88 = sphi 0, %s85
    %s89 = sphi 0, %s88
    %s105 = sphi 0, %s89
    %s115 = sphi 0, %s117
    %s118 = sphi 0, %s115
    %s119 = sphi 0, %s118
    %s135 = sphi 0, %s119
  $region4: #{seperable_conv2d.1} parent=0 // loop_header_branch
    %12 = sbr.rel (%p10) target = $region8
  $region5: #{seperable_conv2d.1} parent=0 // loop_body
    %s14 = ssub.s32 %s9, 1
    %s15 = ssub.s32 %s9, 2
    %s25 = sadd.s32 1, %s18
    %p26 = scmp.ge.s32.totalorder %s25, 1
    %s27 = scalar_select %p26, 0, %s25
    %s28 = sadd.s32 1, %s17
    %s29 = scalar_select %p26, %s28, %s17
    %p30 = scmp.ge.s32.totalorder %s29, 2
    %s31 = scalar_select %p30, 0, %s29
    %s32 = sadd.s32 1, %s16
    %s33 = scalar_select %p30, %s32, %s16
    %p34 = scmp.ge.s32.totalorder %s33, 2
    %s35 = scalar_select %p34, 0, %s33
    %s36 = ssub.s32 %s16, %s35
    %p37 = scmp.eq.s32.totalorder %s36, 0
    %s39 = sadd.s32 %s38, 1
    %s40 = scalar_select %p37, %s38, %s39
    %p43 = pneg %p37
    %p44 = scmp.eq.s32.totalorder %s9, 3
    %p45 = por %p43, %p44
    %p46 = scmp.ne.s32.totalorder %s38, %s41
    %p47 = scmp.eq.s32.totalorder %s9, 0
    %p48 = por %p46, %p47
    %p49 = scmp.ne.s32.totalorder %s38, %s41
    %p50 = scmp.eq.s32.totalorder %s14, 3
    %p51 = por %p49, %p50
    %p52 = scmp.ne.s32.totalorder %s41, %s42
    %p53 = scmp.eq.s32.totalorder %s14, 0
    %p54 = por %p52, %p53
    %p55 = scmp.ne.s32.totalorder %s41, %s42
    %p56 = scmp.eq.s32.totalorder %s15, 3
    %p57 = por %p55, %p56
    %p59 = scmp.ne.s32.totalorder %s42, %s58
    %p60 = scmp.eq.s32.totalorder %s15, 0
    %p61 = por %p59, %p60
    %s63 = sadd.s32 %s62, 1
    %p66 = scmp.eq.s32.totalorder %s9, 3
    %p67 = scmp.ne.s32.totalorder %s62, %s64
    %p68 = scmp.eq.s32.totalorder %s9, 0
    %p69 = por %p67, %p68
    %p70 = scmp.ne.s32.totalorder %s62, %s64
    %p71 = scmp.eq.s32.totalorder %s14, 3
    %p72 = por %p70, %p71
    %p73 = scmp.ne.s32.totalorder %s64, %s65
    %p74 = scmp.eq.s32.totalorder %s14, 0
    %p75 = por %p73, %p74
    %p76 = scmp.ne.s32.totalorder %s64, %s65
    %p77 = scmp.eq.s32.totalorder %s15, 3
    %p78 = por %p76, %p77
    %p80 = scmp.ne.s32.totalorder %s65, %s79
    %p81 = scmp.eq.s32.totalorder %s15, 0
    %p82 = por %p80, %p81
    %s83 = ssub.s32 %s18, %s27
    %p84 = scmp.eq.s32.totalorder %s83, 0
    %s86 = sadd.s32 %s85, 1
    %s87 = scalar_select %p84, %s85, %s86
    %p90 = pneg %p84
    %p91 = scmp.eq.s32.totalorder %s9, 3
    %p92 = por %p90, %p91
    %p93 = scmp.ne.s32.totalorder %s85, %s88
    %p94 = scmp.eq.s32.totalorder %s9, 0
    %p95 = por %p93, %p94
    %p96 = scmp.ne.s32.totalorder %s85, %s88
    %p97 = scmp.eq.s32.totalorder %s14, 3
    %p98 = por %p96, %p97
    %p99 = scmp.ne.s32.totalorder %s88, %s89
    %p100 = scmp.eq.s32.totalorder %s14, 0
    %p101 = por %p99, %p100
    %p102 = scmp.ne.s32.totalorder %s88, %s89
    %p103 = scmp.eq.s32.totalorder %s15, 3
    %p104 = por %p102, %p103
    %p106 = scmp.ne.s32.totalorder %s89, %s105
    %p107 = scmp.eq.s32.totalorder %s15, 0
    %p108 = por %p106, %p107
    %s109 = ssub.s32 %s16, %s35
    %s110 = ssub.s32 %s17, %s31
    %s111 = sor.u32 %s109, %s110
    %s112 = ssub.s32 %s18, %s27
    %s113 = sor.u32 %s111, %s112
    %p114 = scmp.eq.s32.totalorder %s113, 0
    %s116 = sadd.s32 %s115, 1
    %s117 = scalar_select %p114, %s115, %s116
    %p120 = pneg %p114
    %p121 = scmp.eq.s32.totalorder %s9, 3
    %p122 = por %p120, %p121
    %p123 = scmp.ne.s32.totalorder %s115, %s118
    %p124 = scmp.eq.s32.totalorder %s9, 0
    %p125 = por %p123, %p124
    %p126 = scmp.ne.s32.totalorder %s115, %s118
    %p127 = scmp.eq.s32.totalorder %s14, 3
    %p128 = por %p126, %p127
    %p129 = scmp.ne.s32.totalorder %s118, %s119
    %p130 = scmp.eq.s32.totalorder %s14, 0
    %p131 = por %p129, %p130
    %p132 = scmp.ne.s32.totalorder %s118, %s119
    %p133 = scmp.eq.s32.totalorder %s15, 3
    %p134 = por %p132, %p133
    %p136 = scmp.ne.s32.totalorder %s119, %s135
    %p137 = scmp.eq.s32.totalorder %s15, 0
    %p138 = por %p136, %p137
    %p139 = scmp.le.s32.totalorder 1, %s9
    %p140 = scmp.lt.s32.totalorder %s9, 5
    %p141 = pnand %p139, %p140
    %p142 = pneg %p141
    // Predicated region
    $region9: #{seperable_conv2d.1} parent=5 // pred_check
      _
    $region10: #{seperable_conv2d.1} parent=5 // pred_check_branch
      %144 = sbr.rel (%p141) target = $region12
    $region11: #{seperable_conv2d.1} parent=5 // pred_region
      %s145 = ssub.s32 %s9, 1
      // Predicated region
      $region13: #{seperable_conv2d.1} parent=11 // pred_check
        %p146 = pneg %p75
      $region14: #{seperable_conv2d.1} parent=11 // pred_check_branch
        %148 = sbr.rel (%p146) target = $region16
      $region15: #{seperable_conv2d.1} parent=11 // pred_region
        _
      $region16: #{seperable_conv2d.1} parent=11 // pred_fallthru
        _
      // Predicated region
      $region17: #{seperable_conv2d.1} parent=11 // pred_check
        %p149 = pneg %p101
      $region18: #{seperable_conv2d.1} parent=11 // pred_check_branch
        %151 = sbr.rel (%p149) target = $region20
      $region19: #{seperable_conv2d.1} parent=11 // pred_region
        %p152 = scmp.lt.s32.totalorder %s21, 0
        %s153 = scalar_select %p152, %s21, 0
        %s154 = smul.addr %s153, 2
        %s155 = scalar_lea.vmem %s2, %s154
      $region20: #{seperable_conv2d.1} parent=11 // pred_fallthru
        _
    $region12: #{seperable_conv2d.1} parent=5 // pred_fallthru
      _
    %p156 = scmp.lt.s32.totalorder %s9, 4
    // Predicated region
    $region21: #{seperable_conv2d.1} parent=5 // pred_check
      %p157 = pneg %p156
    $region22: #{seperable_conv2d.1} parent=5 // pred_check_branch
      %159 = sbr.rel (%p157) target = $region24
    $region23: #{seperable_conv2d.1} parent=5 // pred_region
      // Predicated region
      $region25: #{seperable_conv2d.1} parent=23 // pred_check
        %p160 = pneg %p48
      $region26: #{seperable_conv2d.1} parent=23 // pred_check_branch
        %162 = sbr.rel (%p160) target = $region28
      $region27: #{seperable_conv2d.1} parent=23 // pred_region
        %p163 = scmp.lt.s32.totalorder %s16, 1
        %s164 = scalar_select %p163, %s16, 1
        %s165 = smul.addr %s164, 54
        %s166 = smul.addr %s165, 8
        %s167 = scalar_lea.vmem %s0, %s166
      $region28: #{seperable_conv2d.1} parent=23 // pred_fallthru
        _
    $region24: #{seperable_conv2d.1} parent=5 // pred_fallthru
      _
    %p168 = scmp.le.s32.totalorder 1, %s9
    %p169 = scmp.lt.s32.totalorder %s9, 5
    %p170 = pnand %p168, %p169
    %p171 = pneg %p170
    // Predicated region
    $region29: #{seperable_conv2d.1} parent=5 // pred_check
      _
    $region30: #{seperable_conv2d.1} parent=5 // pred_check_branch
      %173 = sbr.rel (%p170) target = $region32
    $region31: #{seperable_conv2d.1} parent=5 // pred_region
      %s174 = ssub.s32 %s9, 1
      %p175 = scmp.lt.s32.totalorder %s19, 1
      %s176 = scalar_select %p175, %s19, 1
      %s177 = smul.addr %s176, 54
      %s178 = smul.addr %s177, 8
      %s179 = scalar_lea.vmem %s0, %s178
      %p180 = pneg %p54
      %p181 = pneg %p51
      %p182 = pneg %p75
      %p183 = pneg %p72
      %p184 = scmp.lt.s32.totalorder %s21, 0
      %s185 = scalar_select %p184, %s21, 0
      %s186 = smul.addr %s185, 2
      %s187 = scalar_lea.vmem %s2, %s186
      %p188 = pneg %p101
      %p189 = pneg %p98
      %p190 = pneg %p131
      %p191 = pneg %p128
      %s192 = smul.u32 8, %s20
      %p193 = scmp.lt.s32.totalorder %s19, 1
      %s194 = scalar_select %p193, %s19, 1
      %p195 = scmp.lt.s32.totalorder %s192, 15
      %s196 = scalar_select %p195, %s192, 15
      %p197 = scmp.lt.s32.totalorder %s21, 0
      %s198 = scalar_select %p197, %s21, 0
      %s199 = smul.addr %s196, 2
      %s200 = sadd.s32 %s198, %s199
      %s201 = smul.addr %s194, 32
      %s202 = sadd.s32 %s200, %s201
      %s203 = smul.addr %s202, 8
      %s204 = scalar_lea.vmem %s3, %s203
      %p205 = scmp.lt.s32.totalorder %s19, 1
      %s206 = scalar_select %p205, %s19, 1
      %s207 = smul.addr %s206, 54
      %s208 = smul.addr %s207, 8
      %s209 = scalar_lea.vmem %s0, %s208
      %p210 = scmp.lt.s32.totalorder %s21, 0
      %s211 = scalar_select %p210, %s21, 0
      %s212 = smul.addr %s211, 2
      %s213 = scalar_lea.vmem %s2, %s212
      %s214 = smul.u32 8, %s20
      %p215 = scmp.lt.s32.totalorder %s19, 1
      %s216 = scalar_select %p215, %s19, 1
      %p217 = scmp.lt.s32.totalorder %s214, 15
      %s218 = scalar_select %p217, %s214, 15
      %p219 = scmp.lt.s32.totalorder %s21, 0
      %s220 = scalar_select %p219, %s21, 0
      %s221 = smul.addr %s218, 2
      %s222 = sadd.s32 %s220, %s221
      %s223 = smul.addr %s216, 32
      %s224 = sadd.s32 %s222, %s223
      %s225 = smul.addr %s224, 8
      %s226 = scalar_lea.vmem %s3, %s225
      %s227 = smul.u32 8, %s20
      %p229 = scmp.eq.s32.totalorder %s21, 0
      // Predicated region
      $region33: #{seperable_conv2d.1} parent=31 // pred_check
        %p230 = pneg %p229
      $region34: #{seperable_conv2d.1} parent=31 // pred_check_branch
        %232 = sbr.rel (%p230) target = $region36
      $region35: #{seperable_conv2d.1} parent=31 // pred_region
        %s233 = smul.u32 %s20, 8
        %s234 = smul.u32 %s233, 24
        %s235 = scalar_lea.vmem %s209, %s234
        %v236 = vld [vmem:[%s235] sm:$0xff]
        %v237 = vld [vmem:[%s235 + $0x8] sm:$0xff]
        %v238 = vld [vmem:[%s235 + $0x10] sm:$0xff]
        %v239 = vld [vmem:[%s235 + $0x18] sm:$0xff]
        %v240 = vld [vmem:[%s235 + $0x20] sm:$0xff]
        %v241 = vld [vmem:[%s235 + $0x28] sm:$0xff]
        %v242 = vld [vmem:[%s235 + $0x30] sm:$0xff]
        %v243 = vld [vmem:[%s235 + $0x38] sm:$0xff]
        %v244 = vld [vmem:[%s235 + $0x40] sm:$0xff]
        %v245 = vld [vmem:[%s235 + $0x48] sm:$0xff]
        %v246 = vld [vmem:[%s235 + $0x50] sm:$0xff]
        %v247 = vld [vmem:[%s235 + $0x58] sm:$0xff]
        %v248 = vld [vmem:[%s235 + $0x60] sm:$0xff]
        %v249 = vld [vmem:[%s235 + $0x68] sm:$0xff]
        %v250 = vld [vmem:[%s235 + $0x70] sm:$0xff]
        %v251 = vld [vmem:[%s235 + $0x78] sm:$0xff]
        %v252 = vld [vmem:[%s235 + $0x80] sm:$0xff]
        %v253 = vld [vmem:[%s235 + $0x88] sm:$0xff]
        %v254 = vld [vmem:[%s235 + $0x90] sm:$0xff]
        %v255 = vld [vmem:[%s235 + $0x98] sm:$0xff]
        %v256 = vld [vmem:[%s235 + $0xa0] sm:$0xff]
        %v257 = vld [vmem:[%s235 + $0xa8] sm:$0xff]
        %v258 = vld [vmem:[%s235 + $0xb0] sm:$0xff]
        %v259 = vld [vmem:[%s235 + $0xb8] sm:$0xff]
        %v260 = vld [vmem:[%s235 + $0xc0] sm:$0xff]
        %v261 = vld [vmem:[%s235 + $0xc8] sm:$0xff]
        %v262 = vld [vmem:[%s235 + $0xd0] sm:$0xff]
        %v263 = vld [vmem:[%s235 + $0xd8] sm:$0xff]
        %v264 = vld [vmem:[%s235 + $0xe0] sm:$0xff]
        %v265 = vld [vmem:[%s235 + $0xe8] sm:$0xff]
        %v266 = vld [vmem:[%s1] sm:$0x1]
        %v267 = vlaneseq
        %v268 = vshrl.u32 %v267, 7
        %v269 = vsub.s32 0, %v268
        %v270 = vrot.slane %v266, %v269
        %v271 = vmul.f32 %v236, %v270
        %v272 = vmul.f32 %v237, %v270
        %v273 = vmul.f32 %v239, %v270
        %v274 = vmul.f32 %v240, %v270
        %v275 = vmul.f32 %v242, %v270
        %v276 = vmul.f32 %v243, %v270
        %v277 = vmul.f32 %v245, %v270
        %v278 = vmul.f32 %v246, %v270
        %v279 = vmul.f32 %v248, %v270
        %v280 = vmul.f32 %v249, %v270
        %v281 = vmul.f32 %v251, %v270
        %v282 = vmul.f32 %v252, %v270
        %v283 = vmul.f32 %v254, %v270
        %v284 = vmul.f32 %v255, %v270
        %v285 = vmul.f32 %v257, %v270
        %v286 = vmul.f32 %v258, %v270
        %v287 = vadd.f32 %v271, 0.0
        %v288 = vadd.f32 %v272, 0.0
        %v289 = vadd.f32 %v273, 0.0
        %v290 = vadd.f32 %v274, 0.0
        %v291 = vadd.f32 %v275, 0.0
        %v292 = vadd.f32 %v276, 0.0
        %v293 = vadd.f32 %v277, 0.0
        %v294 = vadd.f32 %v278, 0.0
        %v295 = vadd.f32 %v279, 0.0
        %v296 = vadd.f32 %v280, 0.0
        %v297 = vadd.f32 %v281, 0.0
        %v298 = vadd.f32 %v282, 0.0
        %v299 = vadd.f32 %v283, 0.0
        %v300 = vadd.f32 %v284, 0.0
        %v301 = vadd.f32 %v285, 0.0
        %v302 = vadd.f32 %v286, 0.0
        %v303 = vld [vmem:[%s1 + $0x1] sm:$0x1]
        %v304 = vlaneseq
        %v305 = vshrl.u32 %v304, 7
        %v306 = vsub.s32 0, %v305
        %v307 = vrot.slane %v303, %v306
        %v308 = vmul.f32 %v236, %v307
        %v309 = vmul.f32 %v237, %v307
        %v310 = vmul.f32 %v238, %v307
        %v311 = vmul.f32 %v239, %v307
        %v312 = vmul.f32 %v240, %v307
        %v313 = vmul.f32 %v241, %v307
        %v314 = vmul.f32 %v242, %v307
        %v315 = vmul.f32 %v243, %v307
        %v316 = vmul.f32 %v244, %v307
        %v317 = vmul.f32 %v245, %v307
        %v318 = vmul.f32 %v246, %v307
        %v319 = vmul.f32 %v247, %v307
        %v320 = vmul.f32 %v248, %v307
        %v321 = vmul.f32 %v249, %v307
        %v322 = vmul.f32 %v250, %v307
        %v323 = vmul.f32 %v251, %v307
        %v324 = vmul.f32 %v252, %v307
        %v325 = vmul.f32 %v253, %v307
        %v326 = vmul.f32 %v254, %v307
        %v327 = vmul.f32 %v255, %v307
        %v328 = vmul.f32 %v256, %v307
        %v329 = vmul.f32 %v257, %v307
        %v330 = vmul.f32 %v258, %v307
        %v331 = vmul.f32 %v259, %v307
        %vm356 = vcmask 1046528
        %v357 = vrot.slane %v308, 1
        %v358 = vrot.slane %v309, 1
        %v359 = vsel %vm356, %v357, %v358
        %v360 = vrot.slane %v310, 1
        %v361 = vsel %vm356, %v358, %v360
        %v362 = vrot.slane %v311, 1
        %v363 = vrot.slane %v312, 1
        %v364 = vsel %vm356, %v362, %v363
        %v365 = vrot.slane %v313, 1
        %v366 = vsel %vm356, %v363, %v365
        %v367 = vrot.slane %v314, 1
        %v368 = vrot.slane %v315, 1
        %v369 = vsel %vm356, %v367, %v368
        %v370 = vrot.slane %v316, 1
        %v371 = vsel %vm356, %v368, %v370
        %v372 = vrot.slane %v317, 1
        %v373 = vrot.slane %v318, 1
        %v374 = vsel %vm356, %v372, %v373
        %v375 = vrot.slane %v319, 1
        %v376 = vsel %vm356, %v373, %v375
        %v377 = vrot.slane %v320, 1
        %v378 = vrot.slane %v321, 1
        %v379 = vsel %vm356, %v377, %v378
        %v380 = vrot.slane %v322, 1
        %v381 = vsel %vm356, %v378, %v380
        %v382 = vrot.slane %v323, 1
        %v383 = vrot.slane %v324, 1
        %v384 = vsel %vm356, %v382, %v383
        %v385 = vrot.slane %v325, 1
        %v386 = vsel %vm356, %v383, %v385
        %v387 = vrot.slane %v326, 1
        %v388 = vrot.slane %v327, 1
        %v389 = vsel %vm356, %v387, %v388
        %v390 = vrot.slane %v328, 1
        %v391 = vsel %vm356, %v388, %v390
        %v392 = vrot.slane %v329, 1
        %v393 = vrot.slane %v330, 1
        %v394 = vsel %vm356, %v392, %v393
        %v395 = vrot.slane %v331, 1
        %v396 = vsel %vm356, %v393, %v395
        %v413 = vadd.f32 %v287, %v359
        %v414 = vadd.f32 %v288, %v361
        %v415 = vadd.f32 %v289, %v364
        %v416 = vadd.f32 %v290, %v366
        %v417 = vadd.f32 %v291, %v369
        %v418 = vadd.f32 %v292, %v371
        %v419 = vadd.f32 %v293, %v374
        %v420 = vadd.f32 %v294, %v376
        %v421 = vadd.f32 %v295, %v379
        %v422 = vadd.f32 %v296, %v381
        %v423 = vadd.f32 %v297, %v384
        %v424 = vadd.f32 %v298, %v386
        %v425 = vadd.f32 %v299, %v389
        %v426 = vadd.f32 %v300, %v391
        %v427 = vadd.f32 %v301, %v394
        %v428 = vadd.f32 %v302, %v396
        %v429 = vld [vmem:[%s1 + $0x2] sm:$0x1]
        %v430 = vlaneseq
        %v431 = vshrl.u32 %v430, 7
        %v432 = vsub.s32 0, %v431
        %v433 = vrot.slane %v429, %v432
        %v434 = vmul.f32 %v236, %v433
        %v435 = vmul.f32 %v237, %v433
        %v436 = vmul.f32 %v238, %v433
        %v437 = vmul.f32 %v239, %v433
        %v438 = vmul.f32 %v240, %v433
        %v439 = vmul.f32 %v241, %v433
        %v440 = vmul.f32 %v242, %v433
        %v441 = vmul.f32 %v243, %v433
        %v442 = vmul.f32 %v244, %v433
        %v443 = vmul.f32 %v245, %v433
        %v444 = vmul.f32 %v246, %v433
        %v445 = vmul.f32 %v247, %v433
        %v446 = vmul.f32 %v248, %v433
        %v447 = vmul.f32 %v249, %v433
        %v448 = vmul.f32 %v250, %v433
        %v449 = vmul.f32 %v251, %v433
        %v450 = vmul.f32 %v252, %v433
        %v451 = vmul.f32 %v253, %v433
        %v452 = vmul.f32 %v254, %v433
        %v453 = vmul.f32 %v255, %v433
        %v454 = vmul.f32 %v256, %v433
        %v455 = vmul.f32 %v257, %v433
        %v456 = vmul.f32 %v258, %v433
        %v457 = vmul.f32 %v259, %v433
        %vm482 = vcmask 1045504
        %v483 = vrot.slane %v434, 2
        %v484 = vrot.slane %v435, 2
        %v485 = vsel %vm482, %v483, %v484
        %v486 = vrot.slane %v436, 2
        %v487 = vsel %vm482, %v484, %v486
        %v488 = vrot.slane %v437, 2
        %v489 = vrot.slane %v438, 2
        %v490 = vsel %vm482, %v488, %v489
        %v491 = vrot.slane %v439, 2
        %v492 = vsel %vm482, %v489, %v491
        %v493 = vrot.slane %v440, 2
        %v494 = vrot.slane %v441, 2
        %v495 = vsel %vm482, %v493, %v494
        %v496 = vrot.slane %v442, 2
        %v497 = vsel %vm482, %v494, %v496
        %v498 = vrot.slane %v443, 2
        %v499 = vrot.slane %v444, 2
        %v500 = vsel %vm482, %v498, %v499
        %v501 = vrot.slane %v445, 2
        %v502 = vsel %vm482, %v499, %v501
        %v503 = vrot.slane %v446, 2
        %v504 = vrot.slane %v447, 2
        %v505 = vsel %vm482, %v503, %v504
        %v506 = vrot.slane %v448, 2
        %v507 = vsel %vm482, %v504, %v506
        %v508 = vrot.slane %v449, 2
        %v509 = vrot.slane %v450, 2
        %v510 = vsel %vm482, %v508, %v509
        %v511 = vrot.slane %v451, 2
        %v512 = vsel %vm482, %v509, %v511
        %v513 = vrot.slane %v452, 2
        %v514 = vrot.slane %v453, 2
        %v515 = vsel %vm482, %v513, %v514
        %v516 = vrot.slane %v454, 2
        %v517 = vsel %vm482, %v514, %v516
        %v518 = vrot.slane %v455, 2
        %v519 = vrot.slane %v456, 2
        %v520 = vsel %vm482, %v518, %v519
        %v521 = vrot.slane %v457, 2
        %v522 = vsel %vm482, %v519, %v521
        %v539 = vadd.f32 %v413, %v485
        %v540 = vadd.f32 %v414, %v487
        %v541 = vadd.f32 %v415, %v490
        %v542 = vadd.f32 %v416, %v492
        %v543 = vadd.f32 %v417, %v495
        %v544 = vadd.f32 %v418, %v497
        %v545 = vadd.f32 %v419, %v500
        %v546 = vadd.f32 %v420, %v502
        %v547 = vadd.f32 %v421, %v505
        %v548 = vadd.f32 %v422, %v507
        %v549 = vadd.f32 %v423, %v510
        %v550 = vadd.f32 %v424, %v512
        %v551 = vadd.f32 %v425, %v515
        %v552 = vadd.f32 %v426, %v517
        %v553 = vadd.f32 %v427, %v520
        %v554 = vadd.f32 %v428, %v522
        %v555 = vld [vmem:[%s1 + $0x3] sm:$0x1]
        %v556 = vlaneseq
        %v557 = vshrl.u32 %v556, 7
        %v558 = vsub.s32 0, %v557
        %v559 = vrot.slane %v555, %v558
        %v560 = vmul.f32 %v239, %v559
        %v561 = vmul.f32 %v240, %v559
        %v562 = vmul.f32 %v242, %v559
        %v563 = vmul.f32 %v243, %v559
        %v564 = vmul.f32 %v245, %v559
        %v565 = vmul.f32 %v246, %v559
        %v566 = vmul.f32 %v248, %v559
        %v567 = vmul.f32 %v249, %v559
        %v568 = vmul.f32 %v251, %v559
        %v569 = vmul.f32 %v252, %v559
        %v570 = vmul.f32 %v254, %v559
        %v571 = vmul.f32 %v255, %v559
        %v572 = vmul.f32 %v257, %v559
        %v573 = vmul.f32 %v258, %v559
        %v574 = vmul.f32 %v260, %v559
        %v575 = vmul.f32 %v261, %v559
        %v576 = vadd.f32 %v539, %v560
        %v577 = vadd.f32 %v540, %v561
        %v578 = vadd.f32 %v541, %v562
        %v579 = vadd.f32 %v542, %v563
        %v580 = vadd.f32 %v543, %v564
        %v581 = vadd.f32 %v544, %v565
        %v582 = vadd.f32 %v545, %v566
        %v583 = vadd.f32 %v546, %v567
        %v584 = vadd.f32 %v547, %v568
        %v585 = vadd.f32 %v548, %v569
        %v586 = vadd.f32 %v549, %v570
        %v587 = vadd.f32 %v550, %v571
        %v588 = vadd.f32 %v551, %v572
        %v589 = vadd.f32 %v552, %v573
        %v590 = vadd.f32 %v553, %v574
        %v591 = vadd.f32 %v554, %v575
        %v592 = vld [vmem:[%s1 + $0x4] sm:$0x1]
        %v593 = vlaneseq
        %v594 = vshrl.u32 %v593, 7
        %v595 = vsub.s32 0, %v594
        %v596 = vrot.slane %v592, %v595
        %v597 = vmul.f32 %v239, %v596
        %v598 = vmul.f32 %v240, %v596
        %v599 = vmul.f32 %v241, %v596
        %v600 = vmul.f32 %v242, %v596
        %v601 = vmul.f32 %v243, %v596
        %v602 = vmul.f32 %v244, %v596
        %v603 = vmul.f32 %v245, %v596
        %v604 = vmul.f32 %v246, %v596
        %v605 = vmul.f32 %v247, %v596
        %v606 = vmul.f32 %v248, %v596
        %v607 = vmul.f32 %v249, %v596
        %v608 = vmul.f32 %v250, %v596
        %v609 = vmul.f32 %v251, %v596
        %v610 = vmul.f32 %v252, %v596
        %v611 = vmul.f32 %v253, %v596
        %v612 = vmul.f32 %v254, %v596
        %v613 = vmul.f32 %v255, %v596
        %v614 = vmul.f32 %v256, %v596
        %v615 = vmul.f32 %v257, %v596
        %v616 = vmul.f32 %v258, %v596
        %v617 = vmul.f32 %v259, %v596
        %v618 = vmul.f32 %v260, %v596
        %v619 = vmul.f32 %v261, %v596
        %v620 = vmul.f32 %v262, %v596
        %v645 = vrot.slane %v597, 1
        %v646 = vrot.slane %v598, 1
        %v647 = vsel %vm356, %v645, %v646
        %v648 = vrot.slane %v599, 1
        %v649 = vsel %vm356, %v646, %v648
        %v650 = vrot.slane %v600, 1
        %v651 = vrot.slane %v601, 1
        %v652 = vsel %vm356, %v650, %v651
        %v653 = vrot.slane %v602, 1
        %v654 = vsel %vm356, %v651, %v653
        %v655 = vrot.slane %v603, 1
        %v656 = vrot.slane %v604, 1
        %v657 = vsel %vm356, %v655, %v656
        %v658 = vrot.slane %v605, 1
        %v659 = vsel %vm356, %v656, %v658
        %v660 = vrot.slane %v606, 1
        %v661 = vrot.slane %v607, 1
        %v662 = vsel %vm356, %v660, %v661
        %v663 = vrot.slane %v608, 1
        %v664 = vsel %vm356, %v661, %v663
        %v665 = vrot.slane %v609, 1
        %v666 = vrot.slane %v610, 1
        %v667 = vsel %vm356, %v665, %v666
        %v668 = vrot.slane %v611, 1
        %v669 = vsel %vm356, %v666, %v668
        %v670 = vrot.slane %v612, 1
        %v671 = vrot.slane %v613, 1
        %v672 = vsel %vm356, %v670, %v671
        %v673 = vrot.slane %v614, 1
        %v674 = vsel %vm356, %v671, %v673
        %v675 = vrot.slane %v615, 1
        %v676 = vrot.slane %v616, 1
        %v677 = vsel %vm356, %v675, %v676
        %v678 = vrot.slane %v617, 1
        %v679 = vsel %vm356, %v676, %v678
        %v680 = vrot.slane %v618, 1
        %v681 = vrot.slane %v619, 1
        %v682 = vsel %vm356, %v680, %v681
        %v683 = vrot.slane %v620, 1
        %v684 = vsel %vm356, %v681, %v683
        %v701 = vadd.f32 %v576, %v647
        %v702 = vadd.f32 %v577, %v649
        %v703 = vadd.f32 %v578, %v652
        %v704 = vadd.f32 %v579, %v654
        %v705 = vadd.f32 %v580, %v657
        %v706 = vadd.f32 %v581, %v659
        %v707 = vadd.f32 %v582, %v662
        %v708 = vadd.f32 %v583, %v664
        %v709 = vadd.f32 %v584, %v667
        %v710 = vadd.f32 %v585, %v669
        %v711 = vadd.f32 %v586, %v672
        %v712 = vadd.f32 %v587, %v674
        %v713 = vadd.f32 %v588, %v677
        %v714 = vadd.f32 %v589, %v679
        %v715 = vadd.f32 %v590, %v682
        %v716 = vadd.f32 %v591, %v684
        %v717 = vld [vmem:[%s1 + $0x5] sm:$0x1]
        %v718 = vlaneseq
        %v719 = vshrl.u32 %v718, 7
        %v720 = vsub.s32 0, %v719
        %v721 = vrot.slane %v717, %v720
        %v722 = vmul.f32 %v239, %v721
        %v723 = vmul.f32 %v240, %v721
        %v724 = vmul.f32 %v241, %v721
        %v725 = vmul.f32 %v242, %v721
        %v726 = vmul.f32 %v243, %v721
        %v727 = vmul.f32 %v244, %v721
        %v728 = vmul.f32 %v245, %v721
        %v729 = vmul.f32 %v246, %v721
        %v730 = vmul.f32 %v247, %v721
        %v731 = vmul.f32 %v248, %v721
        %v732 = vmul.f32 %v249, %v721
        %v733 = vmul.f32 %v250, %v721
        %v734 = vmul.f32 %v251, %v721
        %v735 = vmul.f32 %v252, %v721
        %v736 = vmul.f32 %v253, %v721
        %v737 = vmul.f32 %v254, %v721
        %v738 = vmul.f32 %v255, %v721
        %v739 = vmul.f32 %v256, %v721
        %v740 = vmul.f32 %v257, %v721
        %v741 = vmul.f32 %v258, %v721
        %v742 = vmul.f32 %v259, %v721
        %v743 = vmul.f32 %v260, %v721
        %v744 = vmul.f32 %v261, %v721
        %v745 = vmul.f32 %v262, %v721
        %v770 = vrot.slane %v722, 2
        %v771 = vrot.slane %v723, 2
        %v772 = vsel %vm482, %v770, %v771
        %v773 = vrot.slane %v724, 2
        %v774 = vsel %vm482, %v771, %v773
        %v775 = vrot.slane %v725, 2
        %v776 = vrot.slane %v726, 2
        %v777 = vsel %vm482, %v775, %v776
        %v778 = vrot.slane %v727, 2
        %v779 = vsel %vm482, %v776, %v778
        %v780 = vrot.slane %v728, 2
        %v781 = vrot.slane %v729, 2
        %v782 = vsel %vm482, %v780, %v781
        %v783 = vrot.slane %v730, 2
        %v784 = vsel %vm482, %v781, %v783
        %v785 = vrot.slane %v731, 2
        %v786 = vrot.slane %v732, 2
        %v787 = vsel %vm482, %v785, %v786
        %v788 = vrot.slane %v733, 2
        %v789 = vsel %vm482, %v786, %v788
        %v790 = vrot.slane %v734, 2
        %v791 = vrot.slane %v735, 2
        %v792 = vsel %vm482, %v790, %v791
        %v793 = vrot.slane %v736, 2
        %v794 = vsel %vm482, %v791, %v793
        %v795 = vrot.slane %v737, 2
        %v796 = vrot.slane %v738, 2
        %v797 = vsel %vm482, %v795, %v796
        %v798 = vrot.slane %v739, 2
        %v799 = vsel %vm482, %v796, %v798
        %v800 = vrot.slane %v740, 2
        %v801 = vrot.slane %v741, 2
        %v802 = vsel %vm482, %v800, %v801
        %v803 = vrot.slane %v742, 2
        %v804 = vsel %vm482, %v801, %v803
        %v805 = vrot.slane %v743, 2
        %v806 = vrot.slane %v744, 2
        %v807 = vsel %vm482, %v805, %v806
        %v808 = vrot.slane %v745, 2
        %v809 = vsel %vm482, %v806, %v808
        %v826 = vadd.f32 %v701, %v772
        %v827 = vadd.f32 %v702, %v774
        %v828 = vadd.f32 %v703, %v777
        %v829 = vadd.f32 %v704, %v779
        %v830 = vadd.f32 %v705, %v782
        %v831 = vadd.f32 %v706, %v784
        %v832 = vadd.f32 %v707, %v787
        %v833 = vadd.f32 %v708, %v789
        %v834 = vadd.f32 %v709, %v792
        %v835 = vadd.f32 %v710, %v794
        %v836 = vadd.f32 %v711, %v797
        %v837 = vadd.f32 %v712, %v799
        %v838 = vadd.f32 %v713, %v802
        %v839 = vadd.f32 %v714, %v804
        %v840 = vadd.f32 %v715, %v807
        %v841 = vadd.f32 %v716, %v809
        %v842 = vld [vmem:[%s1 + $0x6] sm:$0x1]
        %v843 = vlaneseq
        %v844 = vshrl.u32 %v843, 7
        %v845 = vsub.s32 0, %v844
        %v846 = vrot.slane %v842, %v845
        %v847 = vmul.f32 %v242, %v846
        %v848 = vmul.f32 %v243, %v846
        %v849 = vmul.f32 %v245, %v846
        %v850 = vmul.f32 %v246, %v846
        %v851 = vmul.f32 %v248, %v846
        %v852 = vmul.f32 %v249, %v846
        %v853 = vmul.f32 %v251, %v846
        %v854 = vmul.f32 %v252, %v846
        %v855 = vmul.f32 %v254, %v846
        %v856 = vmul.f32 %v255, %v846
        %v857 = vmul.f32 %v257, %v846
        %v858 = vmul.f32 %v258, %v846
        %v859 = vmul.f32 %v260, %v846
        %v860 = vmul.f32 %v261, %v846
        %v861 = vmul.f32 %v263, %v846
        %v862 = vmul.f32 %v264, %v846
        %v863 = vadd.f32 %v826, %v847
        %v864 = vadd.f32 %v827, %v848
        %v865 = vadd.f32 %v828, %v849
        %v866 = vadd.f32 %v829, %v850
        %v867 = vadd.f32 %v830, %v851
        %v868 = vadd.f32 %v831, %v852
        %v869 = vadd.f32 %v832, %v853
        %v870 = vadd.f32 %v833, %v854
        %v871 = vadd.f32 %v834, %v855
        %v872 = vadd.f32 %v835, %v856
        %v873 = vadd.f32 %v836, %v857
        %v874 = vadd.f32 %v837, %v858
        %v875 = vadd.f32 %v838, %v859
        %v876 = vadd.f32 %v839, %v860
        %v877 = vadd.f32 %v840, %v861
        %v878 = vadd.f32 %v841, %v862
        %v879 = vld [vmem:[%s1 + $0x7] sm:$0x1]
        %v880 = vlaneseq
        %v881 = vshrl.u32 %v880, 7
        %v882 = vsub.s32 0, %v881
        %v883 = vrot.slane %v879, %v882
        %v884 = vmul.f32 %v242, %v883
        %v885 = vmul.f32 %v243, %v883
        %v886 = vmul.f32 %v244, %v883
        %v887 = vmul.f32 %v245, %v883
        %v888 = vmul.f32 %v246, %v883
        %v889 = vmul.f32 %v247, %v883
        %v890 = vmul.f32 %v248, %v883
        %v891 = vmul.f32 %v249, %v883
        %v892 = vmul.f32 %v250, %v883
        %v893 = vmul.f32 %v251, %v883
        %v894 = vmul.f32 %v252, %v883
        %v895 = vmul.f32 %v253, %v883
        %v896 = vmul.f32 %v254, %v883
        %v897 = vmul.f32 %v255, %v883
        %v898 = vmul.f32 %v256, %v883
        %v899 = vmul.f32 %v257, %v883
        %v900 = vmul.f32 %v258, %v883
        %v901 = vmul.f32 %v259, %v883
        %v902 = vmul.f32 %v260, %v883
        %v903 = vmul.f32 %v261, %v883
        %v904 = vmul.f32 %v262, %v883
        %v905 = vmul.f32 %v263, %v883
        %v906 = vmul.f32 %v264, %v883
        %v907 = vmul.f32 %v265, %v883
        %v932 = vrot.slane %v884, 1
        %v933 = vrot.slane %v885, 1
        %v934 = vsel %vm356, %v932, %v933
        %v935 = vrot.slane %v886, 1
        %v936 = vsel %vm356, %v933, %v935
        %v937 = vrot.slane %v887, 1
        %v938 = vrot.slane %v888, 1
        %v939 = vsel %vm356, %v937, %v938
        %v940 = vrot.slane %v889, 1
        %v941 = vsel %vm356, %v938, %v940
        %v942 = vrot.slane %v890, 1
        %v943 = vrot.slane %v891, 1
        %v944 = vsel %vm356, %v942, %v943
        %v945 = vrot.slane %v892, 1
        %v946 = vsel %vm356, %v943, %v945
        %v947 = vrot.slane %v893, 1
        %v948 = vrot.slane %v894, 1
        %v949 = vsel %vm356, %v947, %v948
        %v950 = vrot.slane %v895, 1
        %v951 = vsel %vm356, %v948, %v950
        %v952 = vrot.slane %v896, 1
        %v953 = vrot.slane %v897, 1
        %v954 = vsel %vm356, %v952, %v953
        %v955 = vrot.slane %v898, 1
        %v956 = vsel %vm356, %v953, %v955
        %v957 = vrot.slane %v899, 1
        %v958 = vrot.slane %v900, 1
        %v959 = vsel %vm356, %v957, %v958
        %v960 = vrot.slane %v901, 1
        %v961 = vsel %vm356, %v958, %v960
        %v962 = vrot.slane %v902, 1
        %v963 = vrot.slane %v903, 1
        %v964 = vsel %vm356, %v962, %v963
        %v965 = vrot.slane %v904, 1
        %v966 = vsel %vm356, %v963, %v965
        %v967 = vrot.slane %v905, 1
        %v968 = vrot.slane %v906, 1
        %v969 = vsel %vm356, %v967, %v968
        %v970 = vrot.slane %v907, 1
        %v971 = vsel %vm356, %v968, %v970
        %v988 = vadd.f32 %v863, %v934
        %v989 = vadd.f32 %v864, %v936
        %v990 = vadd.f32 %v865, %v939
        %v991 = vadd.f32 %v866, %v941
        %v992 = vadd.f32 %v867, %v944
        %v993 = vadd.f32 %v868, %v946
        %v994 = vadd.f32 %v869, %v949
        %v995 = vadd.f32 %v870, %v951
        %v996 = vadd.f32 %v871, %v954
        %v997 = vadd.f32 %v872, %v956
        %v998 = vadd.f32 %v873, %v959
        %v999 = vadd.f32 %v874, %v961
        %v1000 = vadd.f32 %v875, %v964
        %v1001 = vadd.f32 %v876, %v966
        %v1002 = vadd.f32 %v877, %v969
        %v1003 = vadd.f32 %v878, %v971
        %v1004 = vld [vmem:[%s1 + $0x8] sm:$0x1]
        %v1005 = vlaneseq
        %v1006 = vshrl.u32 %v1005, 7
        %v1007 = vsub.s32 0, %v1006
        %v1008 = vrot.slane %v1004, %v1007
        %v1009 = vmul.f32 %v242, %v1008
        %v1010 = vmul.f32 %v243, %v1008
        %v1011 = vmul.f32 %v244, %v1008
        %v1012 = vmul.f32 %v245, %v1008
        %v1013 = vmul.f32 %v246, %v1008
        %v1014 = vmul.f32 %v247, %v1008
        %v1015 = vmul.f32 %v248, %v1008
        %v1016 = vmul.f32 %v249, %v1008
        %v1017 = vmul.f32 %v250, %v1008
        %v1018 = vmul.f32 %v251, %v1008
        %v1019 = vmul.f32 %v252, %v1008
        %v1020 = vmul.f32 %v253, %v1008
        %v1021 = vmul.f32 %v254, %v1008
        %v1022 = vmul.f32 %v255, %v1008
        %v1023 = vmul.f32 %v256, %v1008
        %v1024 = vmul.f32 %v257, %v1008
        %v1025 = vmul.f32 %v258, %v1008
        %v1026 = vmul.f32 %v259, %v1008
        %v1027 = vmul.f32 %v260, %v1008
        %v1028 = vmul.f32 %v261, %v1008
        %v1029 = vmul.f32 %v262, %v1008
        %v1030 = vmul.f32 %v263, %v1008
        %v1031 = vmul.f32 %v264, %v1008
        %v1032 = vmul.f32 %v265, %v1008
        %v1057 = vrot.slane %v1009, 2
        %v1058 = vrot.slane %v1010, 2
        %v1059 = vsel %vm482, %v1057, %v1058
        %v1060 = vrot.slane %v1011, 2
        %v1061 = vsel %vm482, %v1058, %v1060
        %v1062 = vrot.slane %v1012, 2
        %v1063 = vrot.slane %v1013, 2
        %v1064 = vsel %vm482, %v1062, %v1063
        %v1065 = vrot.slane %v1014, 2
        %v1066 = vsel %vm482, %v1063, %v1065
        %v1067 = vrot.slane %v1015, 2
        %v1068 = vrot.slane %v1016, 2
        %v1069 = vsel %vm482, %v1067, %v1068
        %v1070 = vrot.slane %v1017, 2
        %v1071 = vsel %vm482, %v1068, %v1070
        %v1072 = vrot.slane %v1018, 2
        %v1073 = vrot.slane %v1019, 2
        %v1074 = vsel %vm482, %v1072, %v1073
        %v1075 = vrot.slane %v1020, 2
        %v1076 = vsel %vm482, %v1073, %v1075
        %v1077 = vrot.slane %v1021, 2
        %v1078 = vrot.slane %v1022, 2
        %v1079 = vsel %vm482, %v1077, %v1078
        %v1080 = vrot.slane %v1023, 2
        %v1081 = vsel %vm482, %v1078, %v1080
        %v1082 = vrot.slane %v1024, 2
        %v1083 = vrot.slane %v1025, 2
        %v1084 = vsel %vm482, %v1082, %v1083
        %v1085 = vrot.slane %v1026, 2
        %v1086 = vsel %vm482, %v1083, %v1085
        %v1087 = vrot.slane %v1027, 2
        %v1088 = vrot.slane %v1028, 2
        %v1089 = vsel %vm482, %v1087, %v1088
        %v1090 = vrot.slane %v1029, 2
        %v1091 = vsel %vm482, %v1088, %v1090
        %v1092 = vrot.slane %v1030, 2
        %v1093 = vrot.slane %v1031, 2
        %v1094 = vsel %vm482, %v1092, %v1093
        %v1095 = vrot.slane %v1032, 2
        %v1096 = vsel %vm482, %v1093, %v1095
        %v1113 = vadd.f32 %v988, %v1059
        %v1114 = vadd.f32 %v989, %v1061
        %v1115 = vadd.f32 %v990, %v1064
        %v1116 = vadd.f32 %v991, %v1066
        %v1117 = vadd.f32 %v992, %v1069
        %v1118 = vadd.f32 %v993, %v1071
        %v1119 = vadd.f32 %v994, %v1074
        %v1120 = vadd.f32 %v995, %v1076
        %v1121 = vadd.f32 %v996, %v1079
        %v1122 = vadd.f32 %v997, %v1081
        %v1123 = vadd.f32 %v998, %v1084
        %v1124 = vadd.f32 %v999, %v1086
        %v1125 = vadd.f32 %v1000, %v1089
        %v1126 = vadd.f32 %v1001, %v1091
        %v1127 = vadd.f32 %v1002, %v1094
        %v1128 = vadd.f32 %v1003, %v1096
        %v1129 = vpack.c.bf16 %v1114, %v1113
        %v1130 = vpack.c.bf16 %v1116, %v1115
        %v1131 = vpack.c.bf16 %v1118, %v1117
        %v1132 = vpack.c.bf16 %v1120, %v1119
        %v1133 = vpack.c.bf16 %v1122, %v1121
        %v1134 = vpack.c.bf16 %v1124, %v1123
        %v1135 = vpack.c.bf16 %v1126, %v1125
        %v1136 = vpack.c.bf16 %v1128, %v1127
        %vm1137 = vcmask 31744
        %1138 = vst.msk [vmem:[#allocation2] sm:$0xff] %vm1137, %v1129
        %1139 = vst.msk [vmem:[#allocation2 + $0x8] sm:$0xff] %vm1137, %v1130
        %1140 = vst.msk [vmem:[#allocation2 + $0x10] sm:$0xff] %vm1137, %v1131
        %1141 = vst.msk [vmem:[#allocation2 + $0x18] sm:$0xff] %vm1137, %v1132
        %1142 = vst.msk [vmem:[#allocation2 + $0x20] sm:$0xff] %vm1137, %v1133
        %1143 = vst.msk [vmem:[#allocation2 + $0x28] sm:$0xff] %vm1137, %v1134
        %1144 = vst.msk [vmem:[#allocation2 + $0x30] sm:$0xff] %vm1137, %v1135
        %1145 = vst.msk [vmem:[#allocation2 + $0x38] sm:$0xff] %vm1137, %v1136
      $region36: #{seperable_conv2d.1} parent=31 // pred_fallthru
        _
      %v1146 = vld [vmem:[#allocation2] sm:$0xff]
      %v1147 = vld [vmem:[#allocation2 + $0x8] sm:$0xff]
      %v1148 = vld [vmem:[#allocation2 + $0x10] sm:$0xff]
      %v1149 = vld [vmem:[#allocation2 + $0x18] sm:$0xff]
      %v1150 = vld [vmem:[#allocation2 + $0x20] sm:$0xff]
      %v1151 = vld [vmem:[#allocation2 + $0x28] sm:$0xff]
      %v1152 = vld [vmem:[#allocation2 + $0x30] sm:$0xff]
      %v1153 = vld [vmem:[#allocation2 + $0x38] sm:$0xff]
      %v1154 = vld [vmem:[%s213] sm:$0x3]
      %vm1155 = vcmask 31744
      %v1157 = vsel %vm1155, %v1146, 0
      %v1160 = vsel %vm1155, %v1147, 0
      %v1163 = vsel %vm1155, %v1148, 0
      %v1166 = vsel %vm1155, %v1149, 0
      %v1169 = vsel %vm1155, %v1150, 0
      %v1172 = vsel %vm1155, %v1151, 0
      %v1175 = vsel %vm1155, %v1152, 0
      %v1178 = vsel %vm1155, %v1153, 0
      %vm1180 = vcmask 1041408
      %v1182 = vsel %vm1180, %v1154, 0
      %1184 = vmatprep.subr.bf16.mxu0 0
      %1185 = vmatpush1.bf16.msra.mxu0 %v1182
      %1186 = vmatprep.subr.bf16.mxu0 0
      %1187 = vmatpush1.bf16.msra.mxu0 0
      %1188 = vmatprep.subr.bf16.mxu0 0
      %1189 = vmatpush1.bf16.msra.mxu0 0
      %1190 = vmatprep.subr.bf16.mxu0 0
      %1191 = vmatpush1.bf16.msra.mxu0 0
      %1192 = vmatprep.subr.bf16.mxu0 0
      %1193 = vmatpush1.bf16.msra.mxu0 0
      %1194 = vmatprep.subr.bf16.mxu0 0
      %1195 = vmatpush1.bf16.msra.mxu0 0
      %1196 = vmatprep.subr.bf16.mxu0 0
      %1197 = vmatpush1.bf16.msra.mxu0 0
      %1198 = vmatprep.subr.bf16.mxu0 0
      %1199 = vmatpush1.bf16.msra.mxu0 0
      %1200 = vmatprep.subr.bf16.mxu0 0
      %1201 = vmatpush1.bf16.msra.mxu0 0
      %1202 = vmatprep.subr.bf16.mxu0 0
      %1203 = vmatpush1.bf16.msra.mxu0 0
      %1204 = vmatprep.subr.bf16.mxu0 0
      %1205 = vmatpush1.bf16.msra.mxu0 0
      %1206 = vmatprep.subr.bf16.mxu0 0
      %1207 = vmatpush1.bf16.msra.mxu0 0
      %1208 = vmatprep.subr.bf16.mxu0 0
      %1209 = vmatpush1.bf16.msra.mxu0 0
      %1210 = vmatprep.subr.bf16.mxu0 0
      %1211 = vmatpush1.bf16.msra.mxu0 0
      %1212 = vmatprep.subr.bf16.mxu0 0
      %1213 = vmatpush1.bf16.msra.mxu0 0
      %1214 = vmatprep.subr.bf16.mxu0 0
      %1215 = vmatpush1.bf16.msra.mxu0 0
      %1216 = vmatprep.mubr.bf16.mxu0 0
      %1217 = vmatmul.mubr.bf16.gmra.mrb[0].mxu0 %v1157
      %v1218 = vpop.f32.mrb[0].mxu0
      %v1219 = vadd.f32 0.0, %v1218
      %v1220 = vpop.f32.mrb[0].mxu0
      %v1221 = vpop.f32.mrb[0].mxu0
      %v1222 = vadd.f32 0.0, %v1221
      %v1223 = vpop.f32.mrb[0].mxu0
      %1224 = vmatprep.mubr.bf16.mxu0 0
      %1225 = vmatmul.mubr.bf16.gmra.mrb[0].mxu0 %v1160
      %v1226 = vpop.f32.mrb[0].mxu0
      %v1227 = vadd.f32 0.0, %v1226
      %v1228 = vpop.f32.mrb[0].mxu0
      %v1229 = vpop.f32.mrb[0].mxu0
      %v1230 = vadd.f32 0.0, %v1229
      %v1231 = vpop.f32.mrb[0].mxu0
      %1232 = vmatprep.mubr.bf16.mxu0 0
      %1233 = vmatmul.mubr.bf16.gmra.mrb[0].mxu0 %v1163
      %v1234 = vpop.f32.mrb[0].mxu0
      %v1235 = vadd.f32 0.0, %v1234
      %v1236 = vpop.f32.mrb[0].mxu0
      %v1237 = vpop.f32.mrb[0].mxu0
      %v1238 = vadd.f32 0.0, %v1237
      %v1239 = vpop.f32.mrb[0].mxu0
      %1240 = vmatprep.mubr.bf16.mxu0 0
      %1241 = vmatmul.mubr.bf16.gmra.mrb[0].mxu0 %v1166
      %v1242 = vpop.f32.mrb[0].mxu0
      %v1243 = vadd.f32 0.0, %v1242
      %v1244 = vpop.f32.mrb[0].mxu0
      %v1245 = vpop.f32.mrb[0].mxu0
      %v1246 = vadd.f32 0.0, %v1245
      %v1247 = vpop.f32.mrb[0].mxu0
      %1248 = vmatprep.mubr.bf16.mxu0 0
      %1249 = vmatmul.mubr.bf16.gmra.mrb[0].mxu0 %v1169
      %v1250 = vpop.f32.mrb[0].mxu0
      %v1251 = vadd.f32 0.0, %v1250
      %v1252 = vpop.f32.mrb[0].mxu0
      %v1253 = vpop.f32.mrb[0].mxu0
      %v1254 = vadd.f32 0.0, %v1253
      %v1255 = vpop.f32.mrb[0].mxu0
      %1256 = vmatprep.mubr.bf16.mxu0 0
      %1257 = vmatmul.mubr.bf16.gmra.mrb[0].mxu0 %v1172
      %v1258 = vpop.f32.mrb[0].mxu0
      %v1259 = vadd.f32 0.0, %v1258
      %v1260 = vpop.f32.mrb[0].mxu0
      %v1261 = vpop.f32.mrb[0].mxu0
      %v1262 = vadd.f32 0.0, %v1261
      %v1263 = vpop.f32.mrb[0].mxu0
      %1264 = vmatprep.mubr.bf16.mxu0 0
      %1265 = vmatmul.mubr.bf16.gmra.mrb[0].mxu0 %v1175
      %v1266 = vpop.f32.mrb[0].mxu0
      %v1267 = vadd.f32 0.0, %v1266
      %v1268 = vpop.f32.mrb[0].mxu0
      %v1269 = vpop.f32.mrb[0].mxu0
      %v1270 = vadd.f32 0.0, %v1269
      %v1271 = vpop.f32.mrb[0].mxu0
      %1272 = vmatprep.mubr.bf16.mxu0 0
      %1273 = vmatmul.mubr.bf16.gmra.mrb[0].mxu0 %v1178
      %v1274 = vpop.f32.mrb[0].mxu0
      %v1275 = vadd.f32 0.0, %v1274
      %v1276 = vpop.f32.mrb[0].mxu0
      %v1277 = vpop.f32.mrb[0].mxu0
      %v1278 = vadd.f32 0.0, %v1277
      %v1279 = vpop.f32.mrb[0].mxu0
      %1280 = vdwg.mxu0
      %vm1281 = vcmask 64512
      %1282 = vst.msk [vmem:[%s226] sm:$0xff] %vm1281, %v1219
      %1283 = vst.msk [vmem:[%s226 + $0x8] sm:$0xff] %vm1281, %v1222
      %1284 = vst.msk [vmem:[%s226 + $0x10] sm:$0xff] %vm1281, %v1227
      %1285 = vst.msk [vmem:[%s226 + $0x18] sm:$0xff] %vm1281, %v1230
      %1286 = vst.msk [vmem:[%s226 + $0x20] sm:$0xff] %vm1281, %v1235
      %1287 = vst.msk [vmem:[%s226 + $0x28] sm:$0xff] %vm1281, %v1238
      %1288 = vst.msk [vmem:[%s226 + $0x30] sm:$0xff] %vm1281, %v1243
      %1289 = vst.msk [vmem:[%s226 + $0x38] sm:$0xff] %vm1281, %v1246
      %1290 = vst.msk [vmem:[%s226 + $0x40] sm:$0xff] %vm1281, %v1251
      %1291 = vst.msk [vmem:[%s226 + $0x48] sm:$0xff] %vm1281, %v1254
      %1292 = vst.msk [vmem:[%s226 + $0x50] sm:$0xff] %vm1281, %v1259
      %1293 = vst.msk [vmem:[%s226 + $0x58] sm:$0xff] %vm1281, %v1262
      %1294 = vst.msk [vmem:[%s226 + $0x60] sm:$0xff] %vm1281, %v1267
      %1295 = vst.msk [vmem:[%s226 + $0x68] sm:$0xff] %vm1281, %v1270
      %1296 = vst.msk [vmem:[%s226 + $0x70] sm:$0xff] %vm1281, %v1275
      %1297 = vst.msk [vmem:[%s226 + $0x78] sm:$0xff] %vm1281, %v1278
      %s1298 = smul.u32 8, %s20
      %p1299 = scmp.lt.s32.totalorder %s19, 1
      %s1300 = scalar_select %p1299, %s19, 1
      %p1301 = scmp.lt.s32.totalorder %s1298, 15
      %s1302 = scalar_select %p1301, %s1298, 15
      %p1303 = scmp.lt.s32.totalorder %s21, 0
      %s1304 = scalar_select %p1303, %s21, 0
      %s1305 = smul.addr %s1302, 2
      %s1306 = sadd.s32 %s1304, %s1305
      %s1307 = smul.addr %s1300, 32
      %s1308 = sadd.s32 %s1306, %s1307
      %s1309 = smul.addr %s1308, 8
      %s1310 = scalar_lea.vmem %s3, %s1309
      // Predicated region
      $region37: #{seperable_conv2d.1} parent=31 // pred_check
        %p1311 = pneg %p128
      $region38: #{seperable_conv2d.1} parent=31 // pred_check_branch
        %1313 = sbr.rel (%p1311) target = $region40
      $region39: #{seperable_conv2d.1} parent=31 // pred_region
        %s1314 = smul.u32 8, %s20
      $region40: #{seperable_conv2d.1} parent=31 // pred_fallthru
        _
    $region32: #{seperable_conv2d.1} parent=5 // pred_fallthru
      _
    %p1315 = scmp.le.s32.totalorder 2, %s9
    // Predicated region
    $region41: #{seperable_conv2d.1} parent=5 // pred_check
      %p1316 = pneg %p1315
    $region42: #{seperable_conv2d.1} parent=5 // pred_check_branch
      %1318 = sbr.rel (%p1316) target = $region44
    $region43: #{seperable_conv2d.1} parent=5 // pred_region
      %s1319 = ssub.s32 %s9, 2
      // Predicated region
      $region45: #{seperable_conv2d.1} parent=43 // pred_check
        %p1320 = pneg %p134
      $region46: #{seperable_conv2d.1} parent=43 // pred_check_branch
        %1322 = sbr.rel (%p1320) target = $region48
      $region47: #{seperable_conv2d.1} parent=43 // pred_region
        %s1323 = smul.u32 8, %s23
        %p1324 = scmp.lt.s32.totalorder %s22, 1
        %s1325 = scalar_select %p1324, %s22, 1
        %p1326 = scmp.lt.s32.totalorder %s1323, 15
        %s1327 = scalar_select %p1326, %s1323, 15
        %p1328 = scmp.lt.s32.totalorder %s24, 0
        %s1329 = scalar_select %p1328, %s24, 0
        %s1330 = smul.addr %s1327, 2
        %s1331 = sadd.s32 %s1329, %s1330
        %s1332 = smul.addr %s1325, 32
        %s1333 = sadd.s32 %s1331, %s1332
        %s1334 = smul.addr %s1333, 8
        %s1335 = scalar_lea.vmem %s3, %s1334
      $region48: #{seperable_conv2d.1} parent=43 // pred_fallthru
        _
    $region44: #{seperable_conv2d.1} parent=5 // pred_fallthru
      _
  $region6: #{seperable_conv2d.1} parent=0 // loop_footer
    %s13 = sadd.s32 1, %s9
  $region7: #{seperable_conv2d.1} parent=0 // loop_footer_branch
    %8 = sbr.rel target = $region3
  $region8: #{seperable_conv2d.1} parent=0 // loop_exit
    _

</llo_original>
